<compile_context>
chip_gen: v7x
topology: tpu7x:2x2x1
jax: 0.10.0
libtpu: 0.0.40
codegen_flags: <defaults>
</compile_context>

<pallas_src>
import functools

import jax
import jax.numpy as jnp
from jax.experimental import pallas as pl
from jax.experimental.pallas import tpu as pltpu

MAX_TILE_B = 1024  # rows per grid step (VMEM-trivial at these feature widths)


def _round_up(n, m):
    return ((n + m - 1) // m) * m


def _pick_act_dtype():
    """bf16 bias-add/tanh on v6e/v7x (bf16 VPU+EUP); f32 on v5e and older."""
    try:
        kind = jax.devices()[0].device_kind.lower()
    except Exception:
        return jnp.float32
    if ("v6" in kind) or ("v7" in kind):
        return jnp.bfloat16
    return jnp.float32


ACT_DTYPE = _pick_act_dtype()


def _mlp_kernel(x_ref, w1_ref, b1_ref, w2_ref, b2_ref, w3_ref, b3_ref, o_ref,
                *, act_dtype):
    """Fused 3-layer MLP, tanh on the hidden layers.

    x_ref:  [TILE_B, S]  bf16
    w*_ref: [in, out]    bf16 (natural shapes, no padding)
    b1/b2:  [1, H]       act_dtype;  b3: [1, A] f32
    o_ref:  [TILE_B, A]  f32
    Matmuls run bf16 on the MXU with f32 accumulation (K/N padded internally by the MXU).
    """
    x = x_ref[...]

    # fc1 + tanh
    h1 = jnp.dot(x, w1_ref[...], preferred_element_type=jnp.float32)
    h1 = jnp.tanh(h1.astype(act_dtype) + b1_ref[...])

    # fc2 + tanh
    h2 = jnp.dot(h1.astype(jnp.bfloat16), w2_ref[...],
                 preferred_element_type=jnp.float32)
    h2 = jnp.tanh(h2.astype(act_dtype) + b2_ref[...])

    # output layer (forward() returns the raw linear output)
    out = jnp.dot(h2.astype(jnp.bfloat16), w3_ref[...],
                  preferred_element_type=jnp.float32)
    o_ref[...] = (out + b3_ref[...]).astype(o_ref.dtype)


def prepare_params(w1, b1, w2, b2, w3, b3, act_dtype=ACT_DTYPE):
    """One-time conversion, hoisted out of the per-call path.

    Weights -> bf16 MXU operands (stored [in, out], i.e. x @ W + b == PyTorch x @ W.T + b),
    hidden biases -> activation dtype, output bias -> f32.
    """
    return (
        jnp.asarray(w1, jnp.bfloat16),
        jnp.asarray(b1, jnp.float32).reshape(1, -1).astype(act_dtype),
        jnp.asarray(w2, jnp.bfloat16),
        jnp.asarray(b2, jnp.float32).reshape(1, -1).astype(act_dtype),
        jnp.asarray(w3, jnp.bfloat16),
        jnp.asarray(b3, jnp.float32).reshape(1, -1),
    )


@jax.jit
def policy_forward(x, params):
    """x: [B, state_dim] f32 -> [B, action_dim] f32 (raw, unscaled forward() output)."""
    w1, b1, w2, b2, w3, b3 = params
    B, S = x.shape
    H = w1.shape[1]
    A = w3.shape[1]

    # Batch tiling: last tile (nearly) full, rows a multiple of 8 sublanes.
    num_tiles = max(1, -(-B // MAX_TILE_B))
    tile_b = _round_up(-(-B // num_tiles), 8)
    b_pad = num_tiles * tile_b

    x_bf16 = x.astype(jnp.bfloat16)
    if b_pad != B:
        x_bf16 = jnp.zeros((b_pad, S), jnp.bfloat16).at[:B].set(x_bf16)

    act_bytes = jnp.dtype(ACT_DTYPE).itemsize
    cost = pl.CostEstimate(
        flops=2 * b_pad * (S * H + H * H + H * A),
        transcendentals=2 * b_pad * H,
        bytes_accessed=(b_pad * S * 2                      # x (bf16)
                        + (S * H + H * H + H * A) * 2      # weights (bf16)
                        + 2 * H * act_bytes + A * 4        # biases
                        + b_pad * A * 4),                  # output (f32)
    )

    out = pl.pallas_call(
        functools.partial(_mlp_kernel, act_dtype=ACT_DTYPE),
        out_shape=jax.ShapeDtypeStruct((b_pad, A), jnp.float32),
        grid=(num_tiles,),
        in_specs=[
            # x: tiled over the batch axis (double-buffered by the pipeline).
            pl.BlockSpec((tile_b, S), lambda i: (i, 0)),
            # Weights / biases: same block every step -> VMEM-resident across the grid.
            pl.BlockSpec((S, H), lambda i: (0, 0)),
            pl.BlockSpec((1, H), lambda i: (0, 0)),
            pl.BlockSpec((H, H), lambda i: (0, 0)),
            pl.BlockSpec((1, H), lambda i: (0, 0)),
            pl.BlockSpec((H, A), lambda i: (0, 0)),
            pl.BlockSpec((1, A), lambda i: (0, 0)),
        ],
        out_specs=pl.BlockSpec((tile_b, A), lambda i: (i, 0)),
        compiler_params=pltpu.CompilerParams(
            dimension_semantics=("parallel",),  # shards batch tiles across TCs on v7x
        ),
        cost_estimate=cost,
    )(x_bf16, w1, b1, w2, b2, w3, b3)

    return out if b_pad == B else out[:B]


def init_params(key, state_dim, hidden_dim, action_dim):
    """Matches PyTorch init: weights ~ N(0, 0.1), biases = 0.

    Weights stored transposed relative to nn.Linear ([in, out] instead of [out, in]);
    the i.i.d. normal distribution makes this equivalent.
    """
    k1, k2, k3 = jax.random.split(key, 3)
    w1 = 0.1 * jax.random.normal(k1, (state_dim, hidden_dim), jnp.float32)
    b1 = jnp.zeros((1, hidden_dim), jnp.float32)
    w2 = 0.1 * jax.random.normal(k2, (hidden_dim, hidden_dim), jnp.float32)
    b2 = jnp.zeros((1, hidden_dim), jnp.float32)
    w3 = 0.1 * jax.random.normal(k3, (hidden_dim, action_dim), jnp.float32)
    b3 = jnp.zeros((1, action_dim), jnp.float32)
    return w1, b1, w2, b2, w3, b3


def reference_forward(x, w1, b1, w2, b2, w3, b3):
    h1 = jnp.tanh(x @ w1 + b1)
    h2 = jnp.tanh(h1 @ w2 + b2)
    return h2 @ w3 + b3


if __name__ == "__main__":
    # Small shapes consistent with the module: 16-dim observation, 4-dim continuous
    # action, hidden_dim=64.
    STATE_DIM, HIDDEN_DIM, ACTION_DIM = 16, 64, 4

    key = jax.random.PRNGKey(0)
    k_x1, k_x2, k_p = jax.random.split(key, 3)
    raw_params = init_params(k_p, STATE_DIM, HIDDEN_DIM, ACTION_DIM)
    params = prepare_params(*raw_params)   # hoisted, one-time cast

    # Case 1: tiny batch (B=8) — single grid step.
    x_small = jax.random.normal(k_x1, (8, STATE_DIM), jnp.float32)
    out_small = jax.block_until_ready(policy_forward(x_small, params))
    ref_small = reference_forward(x_small, *raw_params)
    assert out_small.shape == (8, ACTION_DIM)
    # bf16 MXU operands (and bf16 activations on v6e/v7x) -> loosened tolerance.
    assert jnp.allclose(out_small, ref_small, atol=3e-2, rtol=1e-2), "mismatch (B=8)"

    # Case 2: a batched rollout (B=1040) — exercises the multi-step parallel grid with
    # VMEM-resident weights; tiling gives 2 full tiles of 520 rows, zero padded rows.
    x_big = jax.random.normal(k_x2, (1040, STATE_DIM), jnp.float32)
    out_big = jax.block_until_ready(policy_forward(x_big, params))
    ref_big = reference_forward(x_big, *raw_params)
    assert out_big.shape == (1040, ACTION_DIM)
    assert jnp.allclose(out_big, ref_big, atol=3e-2, rtol=1e-2), "mismatch (B=1040)"

    # Note: act() additionally applies action_scale * tanh(out) on host (numpy);
    # forward() itself returns the raw linear output, which is what we match.
    print("KERNEL_OK")
</pallas_src>

<mosaic_0001>
module attributes {stable_mosaic.version = 11 : i64} {
  func.func @_mlp_kernel(%arg0: i32, %arg1: memref<8x16xbf16, #tpu.memory_space<vmem>>, %arg2: memref<16x64xbf16, #tpu.memory_space<vmem>>, %arg3: memref<1x64xf32, #tpu.memory_space<vmem>>, %arg4: memref<64x64xbf16, #tpu.memory_space<vmem>>, %arg5: memref<1x64xf32, #tpu.memory_space<vmem>>, %arg6: memref<64x4xbf16, #tpu.memory_space<vmem>>, %arg7: memref<1x4xf32, #tpu.memory_space<vmem>>, %arg8: memref<8x4xf32, #tpu.memory_space<vmem>>) attributes {dimension_semantics = [#tpu.dimension_semantics<parallel>], iteration_bounds = array<i64: 1>, scalar_prefetch = 0 : i64, scratch_operands = 0 : i64, tpu.core_type = #tpu.core_type<tc>, window_params = [{transform_indices = @transform_0, window_bounds = array<i64: 8, 16>}, {pipeline_mode = #tpu.pipeline_mode<synchronous>, transform_indices = @transform_1, window_bounds = array<i64: 16, 64>}, {pipeline_mode = #tpu.pipeline_mode<synchronous>, transform_indices = @transform_2, window_bounds = array<i64: 1, 64>}, {pipeline_mode = #tpu.pipeline_mode<synchronous>, transform_indices = @transform_3, window_bounds = array<i64: 64, 64>}, {pipeline_mode = #tpu.pipeline_mode<synchronous>, transform_indices = @transform_4, window_bounds = array<i64: 1, 64>}, {pipeline_mode = #tpu.pipeline_mode<synchronous>, transform_indices = @transform_5, window_bounds = array<i64: 64, 4>}, {pipeline_mode = #tpu.pipeline_mode<synchronous>, transform_indices = @transform_6, window_bounds = array<i64: 1, 4>}, {transform_indices = @transform_7, window_bounds = array<i64: 8, 4>}]} {
    %c0 = arith.constant 0 : index
    %c0_0 = arith.constant 0 : index
    %0 = vector.load %arg1[%c0, %c0_0] : memref<8x16xbf16, #tpu.memory_space<vmem>>, vector<8x16xbf16>
    %c0_1 = arith.constant 0 : index
    %c0_2 = arith.constant 0 : index
    %1 = vector.load %arg2[%c0_1, %c0_2] : memref<16x64xbf16, #tpu.memory_space<vmem>>, vector<16x64xbf16>
    %cst = arith.constant dense<0.000000e+00> : vector<8x64xf32>
    %2 = tpu.matmul %0, %1, %cst {dimension_numbers = #tpu.dot_dimension_numbers<[1], [0], [0], [1], [0, 0, 1, 1], [], []>} : vector<8x16xbf16>, vector<16x64xbf16>, vector<8x64xf32> -> vector<8x64xf32>
    %c0_3 = arith.constant 0 : index
    %c0_4 = arith.constant 0 : index
    %3 = vector.load %arg3[%c0_3, %c0_4] : memref<1x64xf32, #tpu.memory_space<vmem>>, vector<1x64xf32>
    %4 = vector.broadcast %3 : vector<1x64xf32> to vector<8x64xf32>
    %5 = arith.addf %2, %4 : vector<8x64xf32>
    %6 = math.tanh %5 : vector<8x64xf32>
    %7 = arith.truncf %6 : vector<8x64xf32> to vector<8x64xbf16>
    %c0_5 = arith.constant 0 : index
    %c0_6 = arith.constant 0 : index
    %8 = vector.load %arg4[%c0_5, %c0_6] : memref<64x64xbf16, #tpu.memory_space<vmem>>, vector<64x64xbf16>
    %cst_7 = arith.constant dense<0.000000e+00> : vector<8x64xf32>
    %9 = tpu.matmul %7, %8, %cst_7 {dimension_numbers = #tpu.dot_dimension_numbers<[1], [0], [0], [1], [0, 0, 1, 1], [], []>} : vector<8x64xbf16>, vector<64x64xbf16>, vector<8x64xf32> -> vector<8x64xf32>
    %c0_8 = arith.constant 0 : index
    %c0_9 = arith.constant 0 : index
    %10 = vector.load %arg5[%c0_8, %c0_9] : memref<1x64xf32, #tpu.memory_space<vmem>>, vector<1x64xf32>
    %11 = vector.broadcast %10 : vector<1x64xf32> to vector<8x64xf32>
    %12 = arith.addf %9, %11 : vector<8x64xf32>
    %13 = math.tanh %12 : vector<8x64xf32>
    %14 = arith.truncf %13 : vector<8x64xf32> to vector<8x64xbf16>
    %c0_10 = arith.constant 0 : index
    %c0_11 = arith.constant 0 : index
    %15 = vector.load %arg6[%c0_10, %c0_11] : memref<64x4xbf16, #tpu.memory_space<vmem>>, vector<64x4xbf16>
    %cst_12 = arith.constant dense<0.000000e+00> : vector<8x4xf32>
    %16 = tpu.matmul %14, %15, %cst_12 {dimension_numbers = #tpu.dot_dimension_numbers<[1], [0], [0], [1], [0, 0, 1, 1], [], []>} : vector<8x64xbf16>, vector<64x4xbf16>, vector<8x4xf32> -> vector<8x4xf32>
    %c0_13 = arith.constant 0 : index
    %c0_14 = arith.constant 0 : index
    %17 = vector.load %arg7[%c0_13, %c0_14] : memref<1x4xf32, #tpu.memory_space<vmem>>, vector<1x4xf32>
    %18 = vector.broadcast %17 : vector<1x4xf32> to vector<8x4xf32>
    %19 = arith.addf %16, %18 : vector<8x4xf32>
    %c0_15 = arith.constant 0 : index
    %c0_16 = arith.constant 0 : index
    %20 = vector.load %arg8[%c0_15, %c0_16] : memref<8x4xf32, #tpu.memory_space<vmem>>, vector<8x4xf32>
    tpu.vector_store %arg8[%c0_15, %c0_16], %19 {strides = array<i32>} : memref<8x4xf32, #tpu.memory_space<vmem>>, vector<8x4xf32>,
    return
  }
  func.func @transform_0(%arg0: i32) -> (i32, i32) {
    %c0_i32 = arith.constant 0 : i32
    %c0_i32_0 = arith.constant 0 : i32
    return %arg0, %c0_i32 : i32, i32
  }
  func.func @transform_1(%arg0: i32) -> (i32, i32) {
    %c0_i32 = arith.constant 0 : i32
    %c0_i32_0 = arith.constant 0 : i32
    %c0_i32_1 = arith.constant 0 : i32
    return %c0_i32, %c0_i32_0 : i32, i32
  }
  func.func @transform_2(%arg0: i32) -> (i32, i32) {
    %c0_i32 = arith.constant 0 : i32
    %c0_i32_0 = arith.constant 0 : i32
    %c0_i32_1 = arith.constant 0 : i32
    return %c0_i32, %c0_i32_0 : i32, i32
  }
  func.func @transform_3(%arg0: i32) -> (i32, i32) {
    %c0_i32 = arith.constant 0 : i32
    %c0_i32_0 = arith.constant 0 : i32
    %c0_i32_1 = arith.constant 0 : i32
    return %c0_i32, %c0_i32_0 : i32, i32
  }
  func.func @transform_4(%arg0: i32) -> (i32, i32) {
    %c0_i32 = arith.constant 0 : i32
    %c0_i32_0 = arith.constant 0 : i32
    %c0_i32_1 = arith.constant 0 : i32
    return %c0_i32, %c0_i32_0 : i32, i32
  }
  func.func @transform_5(%arg0: i32) -> (i32, i32) {
    %c0_i32 = arith.constant 0 : i32
    %c0_i32_0 = arith.constant 0 : i32
    %c0_i32_1 = arith.constant 0 : i32
    return %c0_i32, %c0_i32_0 : i32, i32
  }
  func.func @transform_6(%arg0: i32) -> (i32, i32) {
    %c0_i32 = arith.constant 0 : i32
    %c0_i32_0 = arith.constant 0 : i32
    %c0_i32_1 = arith.constant 0 : i32
    return %c0_i32, %c0_i32_0 : i32, i32
  }
  func.func @transform_7(%arg0: i32) -> (i32, i32) {
    %c0_i32 = arith.constant 0 : i32
    %c0_i32_0 = arith.constant 0 : i32
    return %arg0, %c0_i32 : i32, i32
  }
}

</mosaic_0001>

<llo_original>
// kernel: policy_forward.1
$region0: #{policy_forward.1}
  #allocation0 [shape = 'u32[]', space=smem, size = 0x4, offset = 0x4, fixed_abs, tag = 'smem constant byte address 0x4 - core index']
  #allocation1 [shape = 'u32[144,128]{1,0:T(1,128)}', space=vmem, size = 0x12000, scoped, tag = 'internal scratch']
  %s0 = inlined_call_operand.vmem [shape: bf16[8,16], index: 0, kind: input, shape index: {}]
  %s1 = inlined_call_operand.vmem [shape: bf16[16,64], index: 1, kind: input, shape index: {}]
  %s2 = inlined_call_operand.vmem [shape: f32[1,64], index: 2, kind: input, shape index: {}]
  %s3 = inlined_call_operand.vmem [shape: bf16[64,64], index: 3, kind: input, shape index: {}]
  %s4 = inlined_call_operand.vmem [shape: f32[1,64], index: 4, kind: input, shape index: {}]
  %s5 = inlined_call_operand.vmem [shape: bf16[64,4], index: 5, kind: input, shape index: {}]
  %s6 = inlined_call_operand.vmem [shape: f32[1,4], index: 6, kind: input, shape index: {}]
  %s7 = inlined_call_operand.vmem [shape: f32[8,4], index: 7, kind: output, shape index: {}]
  %s8 = sld [smem:[#allocation0]]
  $region38: #{policy_forward.1} parent=0
    _
  %s10 = ssub.s32 1, %s8
  %s11 = scalar_select 0, %s10, %s8
  // Predicated region
  $region2: #{policy_forward.1} parent=0 // pred_check
    _
  $region3: #{policy_forward.1} parent=0 // pred_check_branch
    %13 = sbr.rel (0) target = $region5
  $region4: #{policy_forward.1} parent=0 // pred_region
    _
  $region5: #{policy_forward.1} parent=0 // pred_fallthru
    _
  // Predicated region
  $region6: #{policy_forward.1} parent=0 // pred_check
    _
  $region7: #{policy_forward.1} parent=0 // pred_check_branch
    %15 = sbr.rel (0) target = $region9
  $region8: #{policy_forward.1} parent=0 // pred_region
    _
  $region9: #{policy_forward.1} parent=0 // pred_fallthru
    _
  // Predicated region
  $region10: #{policy_forward.1} parent=0 // pred_check
    _
  $region11: #{policy_forward.1} parent=0 // pred_check_branch
    %17 = sbr.rel (0) target = $region13
  $region12: #{policy_forward.1} parent=0 // pred_region
    _
  $region13: #{policy_forward.1} parent=0 // pred_fallthru
    _
  // Predicated region
  $region14: #{policy_forward.1} parent=0 // pred_check
    _
  $region15: #{policy_forward.1} parent=0 // pred_check_branch
    %19 = sbr.rel (0) target = $region17
  $region16: #{policy_forward.1} parent=0 // pred_region
    _
  $region17: #{policy_forward.1} parent=0 // pred_fallthru
    _
  // Predicated region
  $region18: #{policy_forward.1} parent=0 // pred_check
    _
  $region19: #{policy_forward.1} parent=0 // pred_check_branch
    %21 = sbr.rel (0) target = $region21
  $region20: #{policy_forward.1} parent=0 // pred_region
    _
  $region21: #{policy_forward.1} parent=0 // pred_fallthru
    _
  // Predicated region
  $region22: #{policy_forward.1} parent=0 // pred_check
    _
  $region23: #{policy_forward.1} parent=0 // pred_check_branch
    %23 = sbr.rel (0) target = $region25
  $region24: #{policy_forward.1} parent=0 // pred_region
    _
  $region25: #{policy_forward.1} parent=0 // pred_fallthru
    _
  // Predicated region
  $region26: #{policy_forward.1} parent=0 // pred_check
    _
  $region27: #{policy_forward.1} parent=0 // pred_check_branch
    %25 = sbr.rel (0) target = $region29
  $region28: #{policy_forward.1} parent=0 // pred_region
    _
  $region29: #{policy_forward.1} parent=0 // pred_fallthru
    _
  %v27 = vld [vmem:[%s0] sm:$0xf]
  %v28 = vld [vmem:[%s1] sm:$0xf]
  %v29 = vld [vmem:[%s1 + $0x4] sm:$0xf]
  %v30 = vld [vmem:[%s2] sm:$0x1]
  %v32 = vlaneseq
  %v33 = vshrl.u32 %v32, 7
  %v34 = vsub.s32 0, %v33
  %v35 = vrot.slane %v30, %v34
  %v39 = vunpack.c.l.b16 %v28
  %v40 = vunpack.c.l.b16 %v29
  %v41 = vpack.c.b16 %v40, %v39
  %vm43 = vcmask 130048
  %v45 = vsel %vm43, %v27, 0
  %47 = vmatprep.subr.bf16.mxu0 0
  %48 = vmatpush1.bf16.msra.mxu0 %v41
  %49 = vmatprep.subr.bf16.mxu0 0
  %50 = vmatpush1.bf16.msra.mxu0 0
  %51 = vmatprep.subr.bf16.mxu0 0
  %52 = vmatpush1.bf16.msra.mxu0 0
  %53 = vmatprep.subr.bf16.mxu0 0
  %54 = vmatpush1.bf16.msra.mxu0 0
  %55 = vmatprep.subr.bf16.mxu0 0
  %56 = vmatpush1.bf16.msra.mxu0 0
  %57 = vmatprep.subr.bf16.mxu0 0
  %58 = vmatpush1.bf16.msra.mxu0 0
  %59 = vmatprep.subr.bf16.mxu0 0
  %60 = vmatpush1.bf16.msra.mxu0 0
  %61 = vmatprep.subr.bf16.mxu0 0
  %62 = vmatpush1.bf16.msra.mxu0 0
  %63 = vmatprep.subr.bf16.mxu0 0
  %64 = vmatpush1.bf16.msra.mxu0 0
  %65 = vmatprep.subr.bf16.mxu0 0
  %66 = vmatpush1.bf16.msra.mxu0 0
  %67 = vmatprep.subr.bf16.mxu0 0
  %68 = vmatpush1.bf16.msra.mxu0 0
  %69 = vmatprep.subr.bf16.mxu0 0
  %70 = vmatpush1.bf16.msra.mxu0 0
  %71 = vmatprep.subr.bf16.mxu0 0
  %72 = vmatpush1.bf16.msra.mxu0 0
  %73 = vmatprep.subr.bf16.mxu0 0
  %74 = vmatpush1.bf16.msra.mxu0 0
  %75 = vmatprep.subr.bf16.mxu0 0
  %76 = vmatpush1.bf16.msra.mxu0 0
  %77 = vmatprep.subr.bf16.mxu0 0
  %78 = vmatpush1.bf16.msra.mxu0 0
  %79 = vmatprep.mubr.bf16.mxu0 0
  %80 = vmatmul.mubr.bf16.gmra.mrb[0].mxu0 %v45
  %v81 = vpop.f32.mrb[0].mxu0
  %v82 = vadd.f32 %v35, %v81
  %v83 = vpop.f32.mrb[0].mxu0
  %v84 = vpop.f32.mrb[0].mxu0
  %v85 = vpop.f32.mrb[0].mxu0
  %86 = vdwg.mxu0
  %v87 = vtanh.pop %v82
  %v88 = vpack.c.bf16 %v87, %v87
  %v89 = vld [vmem:[%s3] sm:$0xf]
  %v90 = vld [vmem:[%s3 + $0x4] sm:$0xf]
  %v91 = vld [vmem:[%s3 + $0x8] sm:$0xf]
  %v92 = vld [vmem:[%s3 + $0xc] sm:$0xf]
  %v93 = vld [vmem:[%s3 + $0x10] sm:$0xf]
  %v94 = vld [vmem:[%s3 + $0x14] sm:$0xf]
  %v95 = vld [vmem:[%s3 + $0x18] sm:$0xf]
  %v96 = vld [vmem:[%s3 + $0x1c] sm:$0xf]
  %v97 = vld [vmem:[%s4] sm:$0x1]
  %v99 = vlaneseq
  %v100 = vshrl.u32 %v99, 7
  %v101 = vsub.s32 0, %v100
  %v102 = vrot.slane %v97, %v101
  %v112 = vunpack.c.l.b16 %v89
  %v113 = vunpack.c.l.b16 %v90
  %v114 = vunpack.c.l.b16 %v91
  %v115 = vunpack.c.l.b16 %v92
  %v116 = vunpack.c.l.b16 %v93
  %v117 = vunpack.c.l.b16 %v94
  %v118 = vunpack.c.l.b16 %v95
  %v119 = vunpack.c.l.b16 %v96
  %v120 = vpack.c.b16 %v113, %v112
  %v121 = vpack.c.b16 %v115, %v114
  %v122 = vpack.c.b16 %v117, %v116
  %v123 = vpack.c.b16 %v119, %v118
  %vm128 = vcmask 523264
  %v130 = vsel %vm128, %v88, 0
  %132 = vmatprep.subr.bf16.mxu0 0
  %133 = vmatpush1.bf16.msra.mxu0 %v120
  %134 = vmatprep.subr.bf16.mxu0 0
  %135 = vmatpush1.bf16.msra.mxu0 %v121
  %136 = vmatprep.subr.bf16.mxu0 0
  %137 = vmatpush1.bf16.msra.mxu0 %v122
  %138 = vmatprep.subr.bf16.mxu0 0
  %139 = vmatpush1.bf16.msra.mxu0 %v123
  %140 = vmatprep.subr.bf16.mxu0 0
  %141 = vmatpush1.bf16.msra.mxu0 0
  %142 = vmatprep.subr.bf16.mxu0 0
  %143 = vmatpush1.bf16.msra.mxu0 0
  %144 = vmatprep.subr.bf16.mxu0 0
  %145 = vmatpush1.bf16.msra.mxu0 0
  %146 = vmatprep.subr.bf16.mxu0 0
  %147 = vmatpush1.bf16.msra.mxu0 0
  %148 = vmatprep.subr.bf16.mxu0 0
  %149 = vmatpush1.bf16.msra.mxu0 0
  %150 = vmatprep.subr.bf16.mxu0 0
  %151 = vmatpush1.bf16.msra.mxu0 0
  %152 = vmatprep.subr.bf16.mxu0 0
  %153 = vmatpush1.bf16.msra.mxu0 0
  %154 = vmatprep.subr.bf16.mxu0 0
  %155 = vmatpush1.bf16.msra.mxu0 0
  %156 = vmatprep.subr.bf16.mxu0 0
  %157 = vmatpush1.bf16.msra.mxu0 0
  %158 = vmatprep.subr.bf16.mxu0 0
  %159 = vmatpush1.bf16.msra.mxu0 0
  %160 = vmatprep.subr.bf16.mxu0 0
  %161 = vmatpush1.bf16.msra.mxu0 0
  %162 = vmatprep.subr.bf16.mxu0 0
  %163 = vmatpush1.bf16.msra.mxu0 0
  %164 = vmatprep.mubr.bf16.mxu0 0
  %165 = vmatmul.mubr.bf16.gmra.mrb[0].mxu0 %v130
  %v166 = vpop.f32.mrb[0].mxu0
  %v167 = vadd.f32 %v102, %v166
  %v168 = vpop.f32.mrb[0].mxu0
  %v169 = vpop.f32.mrb[0].mxu0
  %v170 = vpop.f32.mrb[0].mxu0
  %171 = vdwg.mxu0
  %v172 = vtanh.pop %v167
  %v173 = vpack.c.bf16 %v172, %v172
  %v174 = vld [vmem:[%s5] sm:$0xf]
  %v175 = vld [vmem:[%s5 + $0x4] sm:$0xf]
  %v176 = vld [vmem:[%s5 + $0x8] sm:$0xf]
  %v177 = vld [vmem:[%s5 + $0xc] sm:$0xf]
  %v178 = vld [vmem:[%s5 + $0x10] sm:$0xf]
  %v179 = vld [vmem:[%s5 + $0x14] sm:$0xf]
  %v180 = vld [vmem:[%s5 + $0x18] sm:$0xf]
  %v181 = vld [vmem:[%s5 + $0x1c] sm:$0xf]
  %v182 = vld [vmem:[%s6] sm:$0x1]
  %v184 = vlaneseq
  %v185 = vshrl.u32 %v184, 7
  %v186 = vsub.s32 0, %v185
  %v187 = vrot.slane %v182, %v186
  %v197 = vunpack.c.l.b16 %v174
  %v198 = vunpack.c.l.b16 %v175
  %v199 = vunpack.c.l.b16 %v176
  %v200 = vunpack.c.l.b16 %v177
  %v201 = vunpack.c.l.b16 %v178
  %v202 = vunpack.c.l.b16 %v179
  %v203 = vunpack.c.l.b16 %v180
  %v204 = vunpack.c.l.b16 %v181
  %v205 = vpack.c.b16 %v198, %v197
  %v206 = vpack.c.b16 %v200, %v199
  %v207 = vpack.c.b16 %v202, %v201
  %v208 = vpack.c.b16 %v204, %v203
  %v214 = vsel %vm128, %v173, 0
  %216 = vmatprep.subr.bf16.mxu0 0
  %217 = vmatpush1.bf16.msra.mxu0 %v205
  %218 = vmatprep.subr.bf16.mxu0 0
  %219 = vmatpush1.bf16.msra.mxu0 %v206
  %220 = vmatprep.subr.bf16.mxu0 0
  %221 = vmatpush1.bf16.msra.mxu0 %v207
  %222 = vmatprep.subr.bf16.mxu0 0
  %223 = vmatpush1.bf16.msra.mxu0 %v208
  %224 = vmatprep.subr.bf16.mxu0 0
  %225 = vmatpush1.bf16.msra.mxu0 0
  %226 = vmatprep.subr.bf16.mxu0 0
  %227 = vmatpush1.bf16.msra.mxu0 0
  %228 = vmatprep.subr.bf16.mxu0 0
  %229 = vmatpush1.bf16.msra.mxu0 0
  %230 = vmatprep.subr.bf16.mxu0 0
  %231 = vmatpush1.bf16.msra.mxu0 0
  %232 = vmatprep.subr.bf16.mxu0 0
  %233 = vmatpush1.bf16.msra.mxu0 0
  %234 = vmatprep.subr.bf16.mxu0 0
  %235 = vmatpush1.bf16.msra.mxu0 0
  %236 = vmatprep.subr.bf16.mxu0 0
  %237 = vmatpush1.bf16.msra.mxu0 0
  %238 = vmatprep.subr.bf16.mxu0 0
  %239 = vmatpush1.bf16.msra.mxu0 0
  %240 = vmatprep.subr.bf16.mxu0 0
  %241 = vmatpush1.bf16.msra.mxu0 0
  %242 = vmatprep.subr.bf16.mxu0 0
  %243 = vmatpush1.bf16.msra.mxu0 0
  %244 = vmatprep.subr.bf16.mxu0 0
  %245 = vmatpush1.bf16.msra.mxu0 0
  %246 = vmatprep.subr.bf16.mxu0 0
  %247 = vmatpush1.bf16.msra.mxu0 0
  %248 = vmatprep.mubr.bf16.mxu0 0
  %249 = vmatmul.mubr.bf16.gmra.mrb[0].mxu0 %v214
  %v250 = vpop.f32.mrb[0].mxu0
  %v251 = vadd.f32 %v187, %v250
  %v252 = vpop.f32.mrb[0].mxu0
  %v253 = vpop.f32.mrb[0].mxu0
  %v254 = vpop.f32.mrb[0].mxu0
  %255 = vdwg.mxu0
  %vm256 = vcmask 31744
  %257 = vst.msk [vmem:[%s7] sm:$0xff] %vm256, %v251
  // Predicated region
  $region30: #{policy_forward.1} parent=0 // pred_check
    _
  $region31: #{policy_forward.1} parent=0 // pred_check_branch
    %259 = sbr.rel (0) target = $region33
  $region32: #{policy_forward.1} parent=0 // pred_region
    _
  $region33: #{policy_forward.1} parent=0 // pred_fallthru
    _
  // Predicated region
  $region34: #{policy_forward.1} parent=0 // pred_check
    _
  $region35: #{policy_forward.1} parent=0 // pred_check_branch
    %261 = sbr.rel (0) target = $region37
  $region36: #{policy_forward.1} parent=0 // pred_region
    _
  $region37: #{policy_forward.1} parent=0 // pred_fallthru
    _

</llo_original>
